<compile_context>
chip_gen: v7x
topology: tpu7x:2x2x1
jax: 0.10.0
libtpu: 0.0.40
codegen_flags: <defaults>
</compile_context>

<pallas_src>
import functools

import jax
import jax.numpy as jnp
from jax import lax
from jax.experimental import pallas as pl
from jax.experimental.pallas import tpu as pltpu

# Head widths in the order the PyTorch module returns them.
HEAD_DIMS = (25, 1, 1, 10, 10, 1)
TOTAL_HEAD_DIM = sum(HEAD_DIMS)   # 48
OUT_PAD = 128                     # lane-dense fused-head output width
LN_EPS = 1e-5
_INV_SQRT2 = 0.7071067811865476


def _policy_kernel(x_ref, w1_ref, b1_ref, wh_ref, bh_ref, out_ref):
    # Trunk linear: bf16 tile @ bf16 weights -> f32 accumulation on the MXU.
    h = jnp.dot(x_ref[...], w1_ref[...], preferred_element_type=jnp.float32)
    h = h + b1_ref[...]

    # Exact GELU (erf) -- matches torch.nn.GELU() default. Elementwise math
    # stays f32 (v5e VPU/EUP have no bf16).
    h = 0.5 * h * (1.0 + lax.erf(h * jnp.float32(_INV_SQRT2)))

    # LayerNorm over features (affine already folded into the head weights).
    # E[h^2] - E[h]^2 form: the two cross-lane reductions are independent.
    mean = jnp.mean(h, axis=-1, keepdims=True)
    mean_sq = jnp.mean(h * h, axis=-1, keepdims=True)
    var = jnp.maximum(mean_sq - mean * mean, 0.0)
    z = (h - mean) * lax.rsqrt(var + jnp.float32(LN_EPS))

    # Dropout(p=0.1) is identity in eval mode.
    # TODO(synk): training-mode dropout (random mask + 1/(1-p) scale) not implemented.

    # All six heads fused & lane-padded: bf16 @ bf16 -> f32 accumulation, then
    # a single unmasked 128-lane store per row.
    out = jnp.dot(z.astype(jnp.bfloat16), wh_ref[...],
                  preferred_element_type=jnp.float32) + bh_ref[...]
    out_ref[...] = out.astype(out_ref.dtype)


def _round_up(n, m):
    return ((n + m - 1) // m) * m


@functools.partial(jax.jit, static_argnames=("tile_b", "out_dtype"))
def arit_policy_forward(x, params, *, tile_b=1024, out_dtype=jnp.float32):
    """x: (B, d_model). Returns the 6 head outputs (B, 25/1/1/10/10/1)."""
    w1, b1, gamma, beta, wh, bh = (
        params["w1"], params["b1"], params["gamma"], params["beta"],
        params["wh"], params["bh"],
    )
    d_model, hidden = w1.shape
    B = x.shape[0]

    # ---- Fold LayerNorm affine into the fused head weights, in f32 (exact). ----
    #   (z*gamma + beta) @ Wh + bh == z @ (gamma[:,None] * Wh) + (beta @ Wh + bh)
    wh_f32 = wh.astype(jnp.float32)
    wh_f = wh_f32 * gamma.astype(jnp.float32).reshape(hidden, 1)
    bh_f = bh.astype(jnp.float32) + beta.astype(jnp.float32) @ wh_f32

    # ---- Lane-pad the fused head output to 128 columns (unmasked stores). ----
    wh_p = jnp.zeros((hidden, OUT_PAD), jnp.float32).at[:, :TOTAL_HEAD_DIM].set(wh_f)
    bh_p = jnp.zeros((1, OUT_PAD), jnp.float32).at[:, :TOTAL_HEAD_DIM].set(bh_f)

    # ---- bf16 matmul operands (MXU-native on v5e/v6e/v7x); biases stay f32. ----
    # In production, pass x already in bf16 to avoid this extra cast pass.
    x_b = x.astype(jnp.bfloat16)
    w1_b = w1.astype(jnp.bfloat16)
    wh_b = wh_p.astype(jnp.bfloat16)
    b1_f = b1.astype(jnp.float32).reshape(1, hidden)

    # ---- Batch tiling: TB multiple of 8 sublanes; ensure >= 2 grid tiles when
    # possible so the "parallel" axis shards across both TCs on v7x. No jnp.pad:
    # the last partial block is handled by Pallas (OOB rows masked on write). ----
    half = _round_up(pl.cdiv(max(B, 1), 2), 8)
    tb = max(8, min(_round_up(int(tile_b), 8), half))
    num_tiles = pl.cdiv(B, tb)

    out_bytes = jnp.dtype(out_dtype).itemsize
    flops = 2 * B * hidden * (d_model + OUT_PAD)
    bytes_accessed = (2 * (B * d_model + d_model * hidden + hidden * OUT_PAD)
                      + 4 * (hidden + OUT_PAD) + out_bytes * B * OUT_PAD)

    out = pl.pallas_call(
        _policy_kernel,
        out_shape=jax.ShapeDtypeStruct((B, OUT_PAD), out_dtype),
        grid_spec=pl.GridSpec(
            grid=(num_tiles,),
            in_specs=[
                pl.BlockSpec((tb, d_model), lambda i: (i, 0)),        # x tile moves
                pl.BlockSpec((d_model, hidden), lambda i: (0, 0)),    # weights stay
                pl.BlockSpec((1, hidden), lambda i: (0, 0)),          # resident in
                pl.BlockSpec((hidden, OUT_PAD), lambda i: (0, 0)),    # VMEM across
                pl.BlockSpec((1, OUT_PAD), lambda i: (0, 0)),         # iterations
            ],
            out_specs=pl.BlockSpec((tb, OUT_PAD), lambda i: (i, 0)),
        ),
        compiler_params=pltpu.CompilerParams(
            dimension_semantics=("parallel",),          # megacore over batch tiles
            vmem_limit_bytes=32 * 1024 * 1024,
        ),
        cost_estimate=pl.CostEstimate(
            flops=flops,
            transcendentals=B * hidden,                 # erf in GELU
            bytes_accessed=bytes_accessed,
        ),
    )(x_b, w1_b, b1_f, wh_b, bh_p)

    # Drop lane padding, then split into the 6 head outputs.
    out = out[:, :TOTAL_HEAD_DIM]
    outs, off = [], 0
    for d in HEAD_DIMS:
        outs.append(out[:, off:off + d])
        off += d
    return tuple(outs)


def init_params(key, d_model, hidden_dim):
    """Deterministic init mimicking PyTorch Linear default (U[-1/sqrt(fan_in), +])."""
    ks = jax.random.split(key, 6)
    lim1 = 1.0 / jnp.sqrt(jnp.float32(d_model))
    limh = 1.0 / jnp.sqrt(jnp.float32(hidden_dim))
    w1 = jax.random.uniform(ks[0], (d_model, hidden_dim), jnp.float32, -lim1, lim1)
    b1 = jax.random.uniform(ks[1], (1, hidden_dim), jnp.float32, -lim1, lim1)
    # PyTorch LayerNorm defaults are gamma=1, beta=0; perturb here so the
    # affine-folding path is actually exercised by the correctness check.
    gamma = 1.0 + 0.1 * jax.random.normal(ks[2], (1, hidden_dim), jnp.float32)
    beta = 0.1 * jax.random.normal(ks[3], (1, hidden_dim), jnp.float32)
    wh = jax.random.uniform(ks[4], (hidden_dim, TOTAL_HEAD_DIM), jnp.float32, -limh, limh)
    bh = jax.random.uniform(ks[5], (1, TOTAL_HEAD_DIM), jnp.float32, -limh, limh)
    return {"w1": w1, "b1": b1, "gamma": gamma, "beta": beta, "wh": wh, "bh": bh}


def _reference_forward(x, params):
    """Pure-JAX f32 reference (un-fused, un-folded) for correctness checking."""
    h = x @ params["w1"] + params["b1"]
    h = 0.5 * h * (1.0 + lax.erf(h / jnp.sqrt(2.0)))
    mean = jnp.mean(h, axis=-1, keepdims=True)
    var = jnp.mean((h - mean) ** 2, axis=-1, keepdims=True)
    z = (h - mean) / jnp.sqrt(var + LN_EPS)
    z = z * params["gamma"] + params["beta"]
    out = z @ params["wh"] + params["bh"]
    outs, off = [], 0
    for d in HEAD_DIMS:
        outs.append(out[:, off:off + d])
        off += d
    return tuple(outs)


if __name__ == "__main__":
    # Small shapes consistent with the module; B chosen so batch tiling
    # exercises multiple grid steps plus a partial (masked) last tile.
    B, D_MODEL, HIDDEN = 40, 128, 128
    TILE_B = 16  # multiple of 8; 40 rows -> 3 tiles, last one partial

    key = jax.random.PRNGKey(0)
    kx, kp = jax.random.split(key)
    x = jax.random.normal(kx, (B, D_MODEL), jnp.float32)
    params = init_params(kp, D_MODEL, HIDDEN)

    refs = _reference_forward(x, params)

    # Explicit small tile (3 grid tiles, partial last block).
    outs = jax.block_until_ready(arit_policy_forward(x, params, tile_b=TILE_B))
    for o, r, d in zip(outs, refs, HEAD_DIMS):
        assert o.shape == (B, d), (o.shape, d)
        assert jnp.allclose(o, r, atol=3e-2, rtol=3e-2), (
            "mismatch vs reference", float(jnp.max(jnp.abs(o - r))))

    # Default tile path (tb capped so the batch still splits into >= 2 tiles).
    outs2 = jax.block_until_ready(arit_policy_forward(x, params))
    for o, r, d in zip(outs2, refs, HEAD_DIMS):
        assert o.shape == (B, d), (o.shape, d)
        assert jnp.allclose(o, r, atol=3e-2, rtol=3e-2), (
            "mismatch vs reference (default tile)", float(jnp.max(jnp.abs(o - r))))

    print("KERNEL_OK")
</pallas_src>

<mosaic_0001>
module attributes {stable_mosaic.version = 11 : i64} {
  func.func @_policy_kernel(%arg0: i32, %arg1: memref<16x128xbf16, #tpu.memory_space<vmem>>, %arg2: memref<128x128xbf16, #tpu.memory_space<vmem>>, %arg3: memref<1x128xf32, #tpu.memory_space<vmem>>, %arg4: memref<128x128xbf16, #tpu.memory_space<vmem>>, %arg5: memref<1x128xf32, #tpu.memory_space<vmem>>, %arg6: memref<16x128xf32, #tpu.memory_space<vmem>>) attributes {dimension_semantics = [#tpu.dimension_semantics<parallel>], iteration_bounds = array<i64: 3>, scalar_prefetch = 0 : i64, scratch_operands = 0 : i64, tpu.core_type = #tpu.core_type<tc>, window_params = [{transform_indices = @transform_0, window_bounds = array<i64: 16, 128>}, {pipeline_mode = #tpu.pipeline_mode<synchronous>, transform_indices = @transform_1, window_bounds = array<i64: 128, 128>}, {pipeline_mode = #tpu.pipeline_mode<synchronous>, transform_indices = @transform_2, window_bounds = array<i64: 1, 128>}, {pipeline_mode = #tpu.pipeline_mode<synchronous>, transform_indices = @transform_3, window_bounds = array<i64: 128, 128>}, {pipeline_mode = #tpu.pipeline_mode<synchronous>, transform_indices = @transform_4, window_bounds = array<i64: 1, 128>}, {transform_indices = @transform_5, window_bounds = array<i64: 16, 128>}]} {
    %c0 = arith.constant 0 : index
    %c0_0 = arith.constant 0 : index
    %0 = vector.load %arg1[%c0, %c0_0] : memref<16x128xbf16, #tpu.memory_space<vmem>>, vector<16x128xbf16>
    %c0_1 = arith.constant 0 : index
    %c0_2 = arith.constant 0 : index
    %1 = vector.load %arg2[%c0_1, %c0_2] : memref<128x128xbf16, #tpu.memory_space<vmem>>, vector<128x128xbf16>
    %cst = arith.constant dense<0.000000e+00> : vector<16x128xf32>
    %2 = tpu.matmul %0, %1, %cst {dimension_numbers = #tpu.dot_dimension_numbers<[1], [0], [0], [1], [0, 0, 1, 1], [], []>} : vector<16x128xbf16>, vector<128x128xbf16>, vector<16x128xf32> -> vector<16x128xf32>
    %c0_3 = arith.constant 0 : index
    %c0_4 = arith.constant 0 : index
    %3 = vector.load %arg3[%c0_3, %c0_4] : memref<1x128xf32, #tpu.memory_space<vmem>>, vector<1x128xf32>
    %4 = vector.broadcast %3 : vector<1x128xf32> to vector<16x128xf32>
    %5 = arith.addf %2, %4 : vector<16x128xf32>
    %cst_5 = arith.constant 5.000000e-01 : f32
    %6 = vector.broadcast %cst_5 : f32 to vector<16x128xf32>
    %7 = arith.mulf %6, %5 : vector<16x128xf32>
    %cst_6 = arith.constant 0.707106769 : f32
    %8 = vector.broadcast %cst_6 : f32 to vector<16x128xf32>
    %9 = arith.mulf %5, %8 : vector<16x128xf32>
    %10 = math.erf %9 : vector<16x128xf32>
    %cst_7 = arith.constant 1.000000e+00 : f32
    %11 = vector.broadcast %cst_7 : f32 to vector<16x128xf32>
    %12 = arith.addf %11, %10 : vector<16x128xf32>
    %13 = arith.mulf %7, %12 : vector<16x128xf32>
    %cst_8 = arith.constant dense<0.000000e+00> : vector<16xf32>
    %14 = vector.multi_reduction <add>, %13, %cst_8 [1] : vector<16x128xf32> to vector<16xf32>
    %15 = vector.shape_cast %14 : vector<16xf32> to vector<16x1xf32>
    %cst_9 = arith.constant 1.280000e+02 : f32
    %16 = vector.broadcast %cst_9 : f32 to vector<16x1xf32>
    %17 = arith.divf %15, %16 : vector<16x1xf32>
    %18 = arith.mulf %13, %13 : vector<16x128xf32>
    %cst_10 = arith.constant dense<0.000000e+00> : vector<16xf32>
    %19 = vector.multi_reduction <add>, %18, %cst_10 [1] : vector<16x128xf32> to vector<16xf32>
    %20 = vector.shape_cast %19 : vector<16xf32> to vector<16x1xf32>
    %cst_11 = arith.constant 1.280000e+02 : f32
    %21 = vector.broadcast %cst_11 : f32 to vector<16x1xf32>
    %22 = arith.divf %20, %21 : vector<16x1xf32>
    %23 = arith.mulf %17, %17 : vector<16x1xf32>
    %24 = arith.subf %22, %23 : vector<16x1xf32>
    %cst_12 = arith.constant 0.000000e+00 : f32
    %25 = vector.broadcast %cst_12 : f32 to vector<16x1xf32>
    %26 = arith.maximumf %24, %25 : vector<16x1xf32>
    %27 = vector.broadcast %17 : vector<16x1xf32> to vector<16x128xf32>
    %28 = arith.subf %13, %27 : vector<16x128xf32>
    %cst_13 = arith.constant 9.99999974E-6 : f32
    %29 = vector.broadcast %cst_13 : f32 to vector<16x1xf32>
    %30 = arith.addf %26, %29 : vector<16x1xf32>
    %31 = math.rsqrt %30 : vector<16x1xf32>
    %32 = vector.broadcast %31 : vector<16x1xf32> to vector<16x128xf32>
    %33 = arith.mulf %28, %32 : vector<16x128xf32>
    %34 = arith.truncf %33 : vector<16x128xf32> to vector<16x128xbf16>
    %c0_14 = arith.constant 0 : index
    %c0_15 = arith.constant 0 : index
    %35 = vector.load %arg4[%c0_14, %c0_15] : memref<128x128xbf16, #tpu.memory_space<vmem>>, vector<128x128xbf16>
    %cst_16 = arith.constant dense<0.000000e+00> : vector<16x128xf32>
    %36 = tpu.matmul %34, %35, %cst_16 {dimension_numbers = #tpu.dot_dimension_numbers<[1], [0], [0], [1], [0, 0, 1, 1], [], []>} : vector<16x128xbf16>, vector<128x128xbf16>, vector<16x128xf32> -> vector<16x128xf32>
    %c0_17 = arith.constant 0 : index
    %c0_18 = arith.constant 0 : index
    %37 = vector.load %arg5[%c0_17, %c0_18] : memref<1x128xf32, #tpu.memory_space<vmem>>, vector<1x128xf32>
    %38 = vector.broadcast %37 : vector<1x128xf32> to vector<16x128xf32>
    %39 = arith.addf %36, %38 : vector<16x128xf32>
    %c0_19 = arith.constant 0 : index
    %c0_20 = arith.constant 0 : index
    %40 = vector.load %arg6[%c0_19, %c0_20] : memref<16x128xf32, #tpu.memory_space<vmem>>, vector<16x128xf32>
    tpu.vector_store %arg6[%c0_19, %c0_20], %39 {strides = array<i32>} : memref<16x128xf32, #tpu.memory_space<vmem>>, vector<16x128xf32>,
    return
  }
  func.func @transform_0(%arg0: i32) -> (i32, i32) {
    %c0_i32 = arith.constant 0 : i32
    %c0_i32_0 = arith.constant 0 : i32
    return %arg0, %c0_i32 : i32, i32
  }
  func.func @transform_1(%arg0: i32) -> (i32, i32) {
    %c0_i32 = arith.constant 0 : i32
    %c0_i32_0 = arith.constant 0 : i32
    %c0_i32_1 = arith.constant 0 : i32
    return %c0_i32, %c0_i32_0 : i32, i32
  }
  func.func @transform_2(%arg0: i32) -> (i32, i32) {
    %c0_i32 = arith.constant 0 : i32
    %c0_i32_0 = arith.constant 0 : i32
    %c0_i32_1 = arith.constant 0 : i32
    return %c0_i32, %c0_i32_0 : i32, i32
  }
  func.func @transform_3(%arg0: i32) -> (i32, i32) {
    %c0_i32 = arith.constant 0 : i32
    %c0_i32_0 = arith.constant 0 : i32
    %c0_i32_1 = arith.constant 0 : i32
    return %c0_i32, %c0_i32_0 : i32, i32
  }
  func.func @transform_4(%arg0: i32) -> (i32, i32) {
    %c0_i32 = arith.constant 0 : i32
    %c0_i32_0 = arith.constant 0 : i32
    %c0_i32_1 = arith.constant 0 : i32
    return %c0_i32, %c0_i32_0 : i32, i32
  }
  func.func @transform_5(%arg0: i32) -> (i32, i32) {
    %c0_i32 = arith.constant 0 : i32
    %c0_i32_0 = arith.constant 0 : i32
    return %arg0, %c0_i32 : i32, i32
  }
}

</mosaic_0001>

<llo_original>
// kernel: arit_policy_forward.1
$region0: #{arit_policy_forward.1}
  #allocation0 [shape = 'u32[]', space=smem, size = 0x4, offset = 0x4, fixed_abs, tag = 'smem constant byte address 0x4 - core index']
  #allocation1 [shape = 'u32[144,128]{1,0:T(1,128)}', space=vmem, size = 0x12000, scoped, tag = 'internal scratch']
  %s0 = inlined_call_operand.vmem [shape: bf16[40,128], index: 0, kind: input, shape index: {}]
  %s1 = inlined_call_operand.vmem [shape: bf16[128,128], index: 1, kind: input, shape index: {}]
  %s2 = inlined_call_operand.vmem [shape: f32[1,128], index: 2, kind: input, shape index: {}]
  %s3 = inlined_call_operand.vmem [shape: bf16[128,128], index: 3, kind: input, shape index: {}]
  %s4 = inlined_call_operand.vmem [shape: f32[1,128], index: 4, kind: input, shape index: {}]
  %s5 = inlined_call_operand.vmem [shape: f32[40,128], index: 5, kind: output, shape index: {}]
  %s6 = sld [smem:[#allocation0]]
  $region101: #{arit_policy_forward.1} parent=0
    _
  %s8 = ssub.s32 1, %s6
  %s9 = scalar_select 0, %s8, %s6
  $region1: #{arit_policy_forward.1} parent=0
    #allocation2 [shape = 'u8[16384]{0}', space=vmem, size = 0x4000, scoped, tag = 'output window, operand 0']
    loop: start=0, step=1, limit=5
    $region2: #{arit_policy_forward.1} parent=1 // loop_pre_header
      _
    $region3: #{arit_policy_forward.1} parent=1 // loop_header
      %s11 = sphi 0, %s15
      %p12 = scmp.ge.s32.totalorder %s11, 5
      %s21 = sphi 0, %s23
      %s24 = sphi 0, %s21
      %s25 = sphi 0, %s24
      %s41 = sphi 0, %s25
      %s45 = sphi 0, %s45
      %s47 = sphi 0, %s45
      %s48 = sphi 0, %s47
      %s62 = sphi 0, %s48
      %s66 = sphi 0, %s66
      %s68 = sphi 0, %s66
      %s69 = sphi 0, %s68
      %s83 = sphi 0, %s69
      %s87 = sphi 0, %s87
      %s89 = sphi 0, %s87
      %s90 = sphi 0, %s89
      %s104 = sphi 0, %s90
      %s108 = sphi 0, %s108
      %s110 = sphi 0, %s108
      %s111 = sphi 0, %s110
      %s125 = sphi 0, %s111
      %s131 = sphi 0, %s133
      %s134 = sphi 0, %s131
      %s135 = sphi 0, %s134
      %s151 = sphi 0, %s135
    $region4: #{arit_policy_forward.1} parent=1 // loop_header_branch
      %14 = sbr.rel (%p12) target = $region8
    $region5: #{arit_policy_forward.1} parent=1 // loop_body
      %s16 = ssub.s32 %s11, 1
      %s17 = ssub.s32 %s11, 2
      %s18 = sadd.s32 %s11, 1
      %s19 = ssub.s32 %s11, %s18
      %p20 = scmp.eq.s32.totalorder %s19, 0
      %s22 = sadd.s32 %s21, 1
      %s23 = scalar_select %p20, %s21, %s22
      %p26 = pneg %p20
      %p27 = scmp.eq.s32.totalorder %s11, 2
      %p28 = por %p26, %p27
      %p29 = scmp.ne.s32.totalorder %s21, %s24
      %p30 = scmp.eq.s32.totalorder %s11, 0
      %p31 = por %p29, %p30
      %p32 = scmp.ne.s32.totalorder %s21, %s24
      %p33 = scmp.eq.s32.totalorder %s16, 2
      %p34 = por %p32, %p33
      %p35 = scmp.ne.s32.totalorder %s24, %s25
      %p36 = scmp.eq.s32.totalorder %s16, 0
      %p37 = por %p35, %p36
      %p38 = scmp.ne.s32.totalorder %s24, %s25
      %p39 = scmp.eq.s32.totalorder %s17, 2
      %p40 = por %p38, %p39
      %p42 = scmp.ne.s32.totalorder %s25, %s41
      %p43 = scmp.eq.s32.totalorder %s17, 0
      %p44 = por %p42, %p43
      %s46 = sadd.s32 %s45, 1
      %p49 = scmp.eq.s32.totalorder %s11, 2
      %p50 = scmp.ne.s32.totalorder %s45, %s47
      %p51 = scmp.eq.s32.totalorder %s11, 0
      %p52 = por %p50, %p51
      %p53 = scmp.ne.s32.totalorder %s45, %s47
      %p54 = scmp.eq.s32.totalorder %s16, 2
      %p55 = por %p53, %p54
      %p56 = scmp.ne.s32.totalorder %s47, %s48
      %p57 = scmp.eq.s32.totalorder %s16, 0
      %p58 = por %p56, %p57
      %p59 = scmp.ne.s32.totalorder %s47, %s48
      %p60 = scmp.eq.s32.totalorder %s17, 2
      %p61 = por %p59, %p60
      %p63 = scmp.ne.s32.totalorder %s48, %s62
      %p64 = scmp.eq.s32.totalorder %s17, 0
      %p65 = por %p63, %p64
      %s67 = sadd.s32 %s66, 1
      %p70 = scmp.eq.s32.totalorder %s11, 2
      %p71 = scmp.ne.s32.totalorder %s66, %s68
      %p72 = scmp.eq.s32.totalorder %s11, 0
      %p73 = por %p71, %p72
      %p74 = scmp.ne.s32.totalorder %s66, %s68
      %p75 = scmp.eq.s32.totalorder %s16, 2
      %p76 = por %p74, %p75
      %p77 = scmp.ne.s32.totalorder %s68, %s69
      %p78 = scmp.eq.s32.totalorder %s16, 0
      %p79 = por %p77, %p78
      %p80 = scmp.ne.s32.totalorder %s68, %s69
      %p81 = scmp.eq.s32.totalorder %s17, 2
      %p82 = por %p80, %p81
      %p84 = scmp.ne.s32.totalorder %s69, %s83
      %p85 = scmp.eq.s32.totalorder %s17, 0
      %p86 = por %p84, %p85
      %s88 = sadd.s32 %s87, 1
      %p91 = scmp.eq.s32.totalorder %s11, 2
      %p92 = scmp.ne.s32.totalorder %s87, %s89
      %p93 = scmp.eq.s32.totalorder %s11, 0
      %p94 = por %p92, %p93
      %p95 = scmp.ne.s32.totalorder %s87, %s89
      %p96 = scmp.eq.s32.totalorder %s16, 2
      %p97 = por %p95, %p96
      %p98 = scmp.ne.s32.totalorder %s89, %s90
      %p99 = scmp.eq.s32.totalorder %s16, 0
      %p100 = por %p98, %p99
      %p101 = scmp.ne.s32.totalorder %s89, %s90
      %p102 = scmp.eq.s32.totalorder %s17, 2
      %p103 = por %p101, %p102
      %p105 = scmp.ne.s32.totalorder %s90, %s104
      %p106 = scmp.eq.s32.totalorder %s17, 0
      %p107 = por %p105, %p106
      %s109 = sadd.s32 %s108, 1
      %p112 = scmp.eq.s32.totalorder %s11, 2
      %p113 = scmp.ne.s32.totalorder %s108, %s110
      %p114 = scmp.eq.s32.totalorder %s11, 0
      %p115 = por %p113, %p114
      %p116 = scmp.ne.s32.totalorder %s108, %s110
      %p117 = scmp.eq.s32.totalorder %s16, 2
      %p118 = por %p116, %p117
      %p119 = scmp.ne.s32.totalorder %s110, %s111
      %p120 = scmp.eq.s32.totalorder %s16, 0
      %p121 = por %p119, %p120
      %p122 = scmp.ne.s32.totalorder %s110, %s111
      %p123 = scmp.eq.s32.totalorder %s17, 2
      %p124 = por %p122, %p123
      %p126 = scmp.ne.s32.totalorder %s111, %s125
      %p127 = scmp.eq.s32.totalorder %s17, 0
      %p128 = por %p126, %p127
      %s129 = ssub.s32 %s11, %s18
      %p130 = scmp.eq.s32.totalorder %s129, 0
      %s132 = sadd.s32 %s131, 1
      %s133 = scalar_select %p130, %s131, %s132
      %p136 = pneg %p130
      %p137 = scmp.eq.s32.totalorder %s11, 2
      %p138 = por %p136, %p137
      %p139 = scmp.ne.s32.totalorder %s131, %s134
      %p140 = scmp.eq.s32.totalorder %s11, 0
      %p141 = por %p139, %p140
      %p142 = scmp.ne.s32.totalorder %s131, %s134
      %p143 = scmp.eq.s32.totalorder %s16, 2
      %p144 = por %p142, %p143
      %p145 = scmp.ne.s32.totalorder %s134, %s135
      %p146 = scmp.eq.s32.totalorder %s16, 0
      %p147 = por %p145, %p146
      %p148 = scmp.ne.s32.totalorder %s134, %s135
      %p149 = scmp.eq.s32.totalorder %s17, 2
      %p150 = por %p148, %p149
      %p152 = scmp.ne.s32.totalorder %s135, %s151
      %p153 = scmp.eq.s32.totalorder %s17, 0
      %p154 = por %p152, %p153
      %p155 = scmp.le.s32.totalorder 1, %s11
      %p156 = scmp.lt.s32.totalorder %s11, 4
      %p157 = pnand %p155, %p156
      %p158 = pneg %p157
      // Predicated region
      $region9: #{arit_policy_forward.1} parent=5 // pred_check
        _
      $region10: #{arit_policy_forward.1} parent=5 // pred_check_branch
        %160 = sbr.rel (%p157) target = $region12
      $region11: #{arit_policy_forward.1} parent=5 // pred_region
        %s161 = ssub.s32 %s11, 1
        // Predicated region
        $region13: #{arit_policy_forward.1} parent=11 // pred_check
          %p162 = pneg %p58
        $region14: #{arit_policy_forward.1} parent=11 // pred_check_branch
          %164 = sbr.rel (%p162) target = $region16
        $region15: #{arit_policy_forward.1} parent=11 // pred_region
          _
        $region16: #{arit_policy_forward.1} parent=11 // pred_fallthru
          _
        // Predicated region
        $region17: #{arit_policy_forward.1} parent=11 // pred_check
          %p165 = pneg %p79
        $region18: #{arit_policy_forward.1} parent=11 // pred_check_branch
          %167 = sbr.rel (%p165) target = $region20
        $region19: #{arit_policy_forward.1} parent=11 // pred_region
          _
        $region20: #{arit_policy_forward.1} parent=11 // pred_fallthru
          _
        // Predicated region
        $region21: #{arit_policy_forward.1} parent=11 // pred_check
          %p168 = pneg %p100
        $region22: #{arit_policy_forward.1} parent=11 // pred_check_branch
          %170 = sbr.rel (%p168) target = $region24
        $region23: #{arit_policy_forward.1} parent=11 // pred_region
          _
        $region24: #{arit_policy_forward.1} parent=11 // pred_fallthru
          _
        // Predicated region
        $region25: #{arit_policy_forward.1} parent=11 // pred_check
          %p171 = pneg %p121
        $region26: #{arit_policy_forward.1} parent=11 // pred_check_branch
          %173 = sbr.rel (%p171) target = $region28
        $region27: #{arit_policy_forward.1} parent=11 // pred_region
          _
        $region28: #{arit_policy_forward.1} parent=11 // pred_fallthru
          _
      $region12: #{arit_policy_forward.1} parent=5 // pred_fallthru
        _
      %p174 = scmp.lt.s32.totalorder %s11, 3
      // Predicated region
      $region29: #{arit_policy_forward.1} parent=5 // pred_check
        %p175 = pneg %p174
      $region30: #{arit_policy_forward.1} parent=5 // pred_check_branch
        %177 = sbr.rel (%p175) target = $region32
      $region31: #{arit_policy_forward.1} parent=5 // pred_region
        // Predicated region
        $region33: #{arit_policy_forward.1} parent=31 // pred_check
          %p178 = pneg %p31
        $region34: #{arit_policy_forward.1} parent=31 // pred_check_branch
          %180 = sbr.rel (%p178) target = $region36
        $region35: #{arit_policy_forward.1} parent=31 // pred_region
          %s181 = smul.u32 2, %s11
          %s182 = ssub.s32 5, %s181
          %p183 = scmp.lt.s32.totalorder %s182, 2
          %s184 = scalar_select %p183, %s182, 2
          %s185 = smul.u32 64, %s184
          %p186 = scmp.lt.s32.totalorder %s181, 4
          %s187 = scalar_select %p186, %s181, 4
          %s188 = smul.addr %s187, 4
          %s189 = scalar_lea.vmem %s0, %s188
          %s190 = smul.u32 2, %s11
          %s191 = ssub.s32 5, %s190
          %p192 = scmp.lt.s32.totalorder %s191, 2
          %s193 = scalar_select %p192, %s191, 2
          %s194 = smul.u32 64, %s193
        $region36: #{arit_policy_forward.1} parent=31 // pred_fallthru
          _
      $region32: #{arit_policy_forward.1} parent=5 // pred_fallthru
        _
      %p195 = scmp.le.s32.totalorder 1, %s11
      %p196 = scmp.lt.s32.totalorder %s11, 4
      %p197 = pnand %p195, %p196
      %p198 = pneg %p197
      // Predicated region
      $region37: #{arit_policy_forward.1} parent=5 // pred_check
        _
      $region38: #{arit_policy_forward.1} parent=5 // pred_check_branch
        %200 = sbr.rel (%p197) target = $region40
      $region39: #{arit_policy_forward.1} parent=5 // pred_region
        %s201 = ssub.s32 %s11, 1
        %s202 = smul.u32 2, %s16
        %s203 = ssub.s32 5, %s202
        %p204 = scmp.lt.s32.totalorder %s203, 2
        %s205 = scalar_select %p204, %s203, 2
        %s206 = smul.u32 64, %s205
        %p207 = scmp.lt.s32.totalorder %s202, 4
        %s208 = scalar_select %p207, %s202, 4
        %s209 = smul.addr %s208, 4
        %s210 = scalar_lea.vmem %s0, %s209
        %p211 = pneg %p37
        %p212 = pneg %p34
        %p213 = pneg %p58
        %p214 = pneg %p55
        %p215 = pneg %p79
        %p216 = pneg %p76
        %p217 = pneg %p100
        %p218 = pneg %p97
        %p219 = pneg %p121
        %p220 = pneg %p118
        %p221 = pneg %p147
        %p222 = pneg %p144
        %s223 = sand.u32 %s134, 1
        %s224 = sand.u32 %s134, 1
        %s225 = smul.addr %s224, 16
        %s226 = scalar_lea.vmem [#allocation2], %s225
        %s227 = smul.u32 2, %s16
        %s228 = ssub.s32 5, %s227
        %p229 = scmp.lt.s32.totalorder %s228, 2
        %s230 = scalar_select %p229, %s228, 2
        %s231 = smul.u32 64, %s230
        %p232 = scmp.lt.s32.totalorder %s227, 4
        %s233 = scalar_select %p232, %s227, 4
        %s234 = smul.addr %s233, 4
        %s235 = scalar_lea.vmem %s0, %s234
        %s236 = smul.u32 2, %s16
        %s237 = ssub.s32 5, %s236
        %p238 = scmp.lt.s32.totalorder %s237, 2
        %s239 = scalar_select %p238, %s237, 2
        %s240 = smul.u32 64, %s239
        %s241 = smul.u32 2, %s16
        %s242 = ssub.s32 5, %s241
        %p243 = scmp.lt.s32.totalorder %s242, 2
        %s244 = scalar_select %p243, %s242, 2
        %s245 = smul.u32 128, %s244
        %v247 = vld [vmem:[%s235] sm:$0xf]
        %v248 = vld [vmem:[%s235 + $0x4] sm:$0xf]
        %v249 = vld [vmem:[%s1] sm:$0xf]
        %v250 = vld [vmem:[%s1 + $0x4] sm:$0xf]
        %v251 = vld [vmem:[%s1 + $0x8] sm:$0xf]
        %v252 = vld [vmem:[%s1 + $0xc] sm:$0xf]
        %v253 = vld [vmem:[%s1 + $0x10] sm:$0xf]
        %v254 = vld [vmem:[%s1 + $0x14] sm:$0xf]
        %v255 = vld [vmem:[%s1 + $0x18] sm:$0xf]
        %v256 = vld [vmem:[%s1 + $0x1c] sm:$0xf]
        %v257 = vld [vmem:[%s1 + $0x20] sm:$0xf]
        %v258 = vld [vmem:[%s1 + $0x24] sm:$0xf]
        %v259 = vld [vmem:[%s1 + $0x28] sm:$0xf]
        %v260 = vld [vmem:[%s1 + $0x2c] sm:$0xf]
        %v261 = vld [vmem:[%s1 + $0x30] sm:$0xf]
        %v262 = vld [vmem:[%s1 + $0x34] sm:$0xf]
        %v263 = vld [vmem:[%s1 + $0x38] sm:$0xf]
        %v264 = vld [vmem:[%s1 + $0x3c] sm:$0xf]
        %v265 = vld [vmem:[%s2] sm:$0x1]
        %v267 = vlaneseq
        %v268 = vshrl.u32 %v267, 7
        %v269 = vsub.s32 0, %v268
        %v270 = vrot.slane %v265, %v269
        %v274 = vunpack.c.l.b16 %v247
        %v275 = vunpack.c.l.b16 %v248
        %v276 = vpack.c.b16 %v275, %v274
        %v294 = vunpack.c.l.b16 %v249
        %v295 = vunpack.c.l.b16 %v250
        %v296 = vunpack.c.l.b16 %v251
        %v297 = vunpack.c.l.b16 %v252
        %v298 = vunpack.c.l.b16 %v253
        %v299 = vunpack.c.l.b16 %v254
        %v300 = vunpack.c.l.b16 %v255
        %v301 = vunpack.c.l.b16 %v256
        %v302 = vunpack.c.l.b16 %v257
        %v303 = vunpack.c.l.b16 %v258
        %v304 = vunpack.c.l.b16 %v259
        %v305 = vunpack.c.l.b16 %v260
        %v306 = vunpack.c.l.b16 %v261
        %v307 = vunpack.c.l.b16 %v262
        %v308 = vunpack.c.l.b16 %v263
        %v309 = vunpack.c.l.b16 %v264
        %v310 = vpack.c.b16 %v295, %v294
        %v311 = vpack.c.b16 %v297, %v296
        %v312 = vpack.c.b16 %v299, %v298
        %v313 = vpack.c.b16 %v301, %v300
        %v314 = vpack.c.b16 %v303, %v302
        %v315 = vpack.c.b16 %v305, %v304
        %v316 = vpack.c.b16 %v307, %v306
        %v317 = vpack.c.b16 %v309, %v308
        %326 = vmatprep.subr.bf16.mxu0 0
        %327 = vmatpush1.bf16.msra.mxu0 %v310
        %328 = vmatprep.subr.bf16.mxu0 0
        %329 = vmatpush1.bf16.msra.mxu0 %v311
        %330 = vmatprep.subr.bf16.mxu0 0
        %331 = vmatpush1.bf16.msra.mxu0 %v312
        %332 = vmatprep.subr.bf16.mxu0 0
        %333 = vmatpush1.bf16.msra.mxu0 %v313
        %334 = vmatprep.subr.bf16.mxu0 0
        %335 = vmatpush1.bf16.msra.mxu0 %v314
        %336 = vmatprep.subr.bf16.mxu0 0
        %337 = vmatpush1.bf16.msra.mxu0 %v315
        %338 = vmatprep.subr.bf16.mxu0 0
        %339 = vmatpush1.bf16.msra.mxu0 %v316
        %340 = vmatprep.subr.bf16.mxu0 0
        %341 = vmatpush1.bf16.msra.mxu0 %v317
        %342 = vmatprep.subr.bf16.mxu0 0
        %343 = vmatpush1.bf16.msra.mxu0 0
        %344 = vmatprep.subr.bf16.mxu0 0
        %345 = vmatpush1.bf16.msra.mxu0 0
        %346 = vmatprep.subr.bf16.mxu0 0
        %347 = vmatpush1.bf16.msra.mxu0 0
        %348 = vmatprep.subr.bf16.mxu0 0
        %349 = vmatpush1.bf16.msra.mxu0 0
        %350 = vmatprep.subr.bf16.mxu0 0
        %351 = vmatpush1.bf16.msra.mxu0 0
        %352 = vmatprep.subr.bf16.mxu0 0
        %353 = vmatpush1.bf16.msra.mxu0 0
        %354 = vmatprep.subr.bf16.mxu0 0
        %355 = vmatpush1.bf16.msra.mxu0 0
        %356 = vmatprep.subr.bf16.mxu0 0
        %357 = vmatpush1.bf16.msra.mxu0 0
        %358 = vmatprep.mubr.bf16.mxu0 0
        %359 = vmatmul.mubr.bf16.gmra.mrb[0].mxu0 %v276
        %v360 = vpop.f32.mrb[0].mxu0
        %v361 = vadd.f32 %v270, %v360
        %v362 = vpop.f32.mrb[0].mxu0
        %v363 = vpop.f32.mrb[0].mxu0
        %v364 = vadd.f32 %v270, %v363
        %v365 = vpop.f32.mrb[0].mxu0
        %366 = vdwg.mxu0
        %v367 = vmul.f32 %v361, 0.5
        %v368 = vmul.f32 %v364, 0.5
        %v369 = vmul.f32 %v361, 0.70710677
        %v370 = vmul.f32 %v364, 0.70710677
        %v371 = verf.f32.pop %v369
        %v372 = verf.f32.pop %v370
        %v373 = vadd.f32 %v371, 1.0
        %v374 = vadd.f32 %v372, 1.0
        %v375 = vmul.f32 %v367, %v373
        %v376 = vmul.f32 %v368, %v374
        %377 = vadd.xlane.f32.xlu0 %v375
        %v378 = vpop.xlane.xlu0 %377
        %379 = vadd.xlane.f32.xlu0 %v376
        %v380 = vpop.xlane.xlu0 %379
        %v381 = vrcp.pop 128.0
        %v382 = vmul.f32 %v378, %v381
        %v383 = vmul.f32 %v380, %v381
        %v384 = vmul.f32 %v375, %v375
        %v385 = vmul.f32 %v376, %v376
        %386 = vadd.xlane.f32.xlu0 %v384
        %v387 = vpop.xlane.xlu0 %386
        %388 = vadd.xlane.f32.xlu0 %v385
        %v389 = vpop.xlane.xlu0 %388
        %v390 = vmul.f32 %v387, %v381
        %v391 = vmul.f32 %v389, %v381
        %v392 = vmul.f32 %v382, %v382
        %v393 = vmul.f32 %v383, %v383
        %v394 = vsub.f32 %v390, %v392
        %v395 = vsub.f32 %v391, %v393
        %v396 = vmax.f32 %v394, 0.0
        %v397 = vmax.f32 %v395, 0.0
        %v398 = vsub.f32 %v375, %v382
        %v399 = vsub.f32 %v376, %v383
        %v400 = vadd.f32 %v396, 1e-05
        %v401 = vadd.f32 %v397, 1e-05
        %v402 = vrsqrt.pop %v400
        %v403 = vrsqrt.pop %v401
        %v404 = vmul.f32 %v398, %v402
        %v405 = vmul.f32 %v399, %v403
        %v406 = vpack.c.bf16 %v405, %v404
        %v407 = vld [vmem:[%s3] sm:$0xf]
        %v408 = vld [vmem:[%s3 + $0x4] sm:$0xf]
        %v409 = vld [vmem:[%s3 + $0x8] sm:$0xf]
        %v410 = vld [vmem:[%s3 + $0xc] sm:$0xf]
        %v411 = vld [vmem:[%s3 + $0x10] sm:$0xf]
        %v412 = vld [vmem:[%s3 + $0x14] sm:$0xf]
        %v413 = vld [vmem:[%s3 + $0x18] sm:$0xf]
        %v414 = vld [vmem:[%s3 + $0x1c] sm:$0xf]
        %v415 = vld [vmem:[%s3 + $0x20] sm:$0xf]
        %v416 = vld [vmem:[%s3 + $0x24] sm:$0xf]
        %v417 = vld [vmem:[%s3 + $0x28] sm:$0xf]
        %v418 = vld [vmem:[%s3 + $0x2c] sm:$0xf]
        %v419 = vld [vmem:[%s3 + $0x30] sm:$0xf]
        %v420 = vld [vmem:[%s3 + $0x34] sm:$0xf]
        %v421 = vld [vmem:[%s3 + $0x38] sm:$0xf]
        %v422 = vld [vmem:[%s3 + $0x3c] sm:$0xf]
        %v423 = vld [vmem:[%s4] sm:$0x1]
        %v425 = vlaneseq
        %v426 = vshrl.u32 %v425, 7
        %v427 = vsub.s32 0, %v426
        %v428 = vrot.slane %v423, %v427
        %v446 = vunpack.c.l.b16 %v407
        %v447 = vunpack.c.l.b16 %v408
        %v448 = vunpack.c.l.b16 %v409
        %v449 = vunpack.c.l.b16 %v410
        %v450 = vunpack.c.l.b16 %v411
        %v451 = vunpack.c.l.b16 %v412
        %v452 = vunpack.c.l.b16 %v413
        %v453 = vunpack.c.l.b16 %v414
        %v454 = vunpack.c.l.b16 %v415
        %v455 = vunpack.c.l.b16 %v416
        %v456 = vunpack.c.l.b16 %v417
        %v457 = vunpack.c.l.b16 %v418
        %v458 = vunpack.c.l.b16 %v419
        %v459 = vunpack.c.l.b16 %v420
        %v460 = vunpack.c.l.b16 %v421
        %v461 = vunpack.c.l.b16 %v422
        %v462 = vpack.c.b16 %v447, %v446
        %v463 = vpack.c.b16 %v449, %v448
        %v464 = vpack.c.b16 %v451, %v450
        %v465 = vpack.c.b16 %v453, %v452
        %v466 = vpack.c.b16 %v455, %v454
        %v467 = vpack.c.b16 %v457, %v456
        %v468 = vpack.c.b16 %v459, %v458
        %v469 = vpack.c.b16 %v461, %v460
        %478 = vmatprep.subr.bf16.mxu0 0
        %479 = vmatpush1.bf16.msra.mxu0 %v462
        %480 = vmatprep.subr.bf16.mxu0 0
        %481 = vmatpush1.bf16.msra.mxu0 %v463
        %482 = vmatprep.subr.bf16.mxu0 0
        %483 = vmatpush1.bf16.msra.mxu0 %v464
        %484 = vmatprep.subr.bf16.mxu0 0
        %485 = vmatpush1.bf16.msra.mxu0 %v465
        %486 = vmatprep.subr.bf16.mxu0 0
        %487 = vmatpush1.bf16.msra.mxu0 %v466
        %488 = vmatprep.subr.bf16.mxu0 0
        %489 = vmatpush1.bf16.msra.mxu0 %v467
        %490 = vmatprep.subr.bf16.mxu0 0
        %491 = vmatpush1.bf16.msra.mxu0 %v468
        %492 = vmatprep.subr.bf16.mxu0 0
        %493 = vmatpush1.bf16.msra.mxu0 %v469
        %494 = vmatprep.subr.bf16.mxu0 0
        %495 = vmatpush1.bf16.msra.mxu0 0
        %496 = vmatprep.subr.bf16.mxu0 0
        %497 = vmatpush1.bf16.msra.mxu0 0
        %498 = vmatprep.subr.bf16.mxu0 0
        %499 = vmatpush1.bf16.msra.mxu0 0
        %500 = vmatprep.subr.bf16.mxu0 0
        %501 = vmatpush1.bf16.msra.mxu0 0
        %502 = vmatprep.subr.bf16.mxu0 0
        %503 = vmatpush1.bf16.msra.mxu0 0
        %504 = vmatprep.subr.bf16.mxu0 0
        %505 = vmatpush1.bf16.msra.mxu0 0
        %506 = vmatprep.subr.bf16.mxu0 0
        %507 = vmatpush1.bf16.msra.mxu0 0
        %508 = vmatprep.subr.bf16.mxu0 0
        %509 = vmatpush1.bf16.msra.mxu0 0
        %510 = vmatprep.mubr.bf16.mxu0 0
        %511 = vmatmul.mubr.bf16.gmra.mrb[0].mxu0 %v406
        %v512 = vpop.f32.mrb[0].mxu0
        %v513 = vadd.f32 %v428, %v512
        %v514 = vpop.f32.mrb[0].mxu0
        %v515 = vpop.f32.mrb[0].mxu0
        %v516 = vadd.f32 %v428, %v515
        %v517 = vpop.f32.mrb[0].mxu0
        %518 = vdwg.mxu0
        %519 = vst [vmem:[%s226] sm:$0xff] %v513
        %520 = vst [vmem:[%s226 + $0x8] sm:$0xff] %v516
        %s521 = sand.u32 %s134, 1
        %s522 = sand.u32 %s134, 1
        %s523 = smul.addr %s522, 16
        %s524 = scalar_lea.vmem [#allocation2], %s523
        // Predicated region
        $region41: #{arit_policy_forward.1} parent=39 // pred_check
          %p525 = pneg %p144
        $region42: #{arit_policy_forward.1} parent=39 // pred_check_branch
          %527 = sbr.rel (%p525) target = $region44
        $region43: #{arit_policy_forward.1} parent=39 // pred_region
          %s528 = smul.u32 2, %s16
          %s529 = ssub.s32 5, %s528
          %p530 = scmp.lt.s32.totalorder %s529, 2
          %s531 = scalar_select %p530, %s529, 2
          %s532 = smul.u32 128, %s531
          %p533 = scmp.ne.s32.totalorder 0, %s532
          %s534 = smul.addr %s528, 8
          %s535 = scalar_lea.vmem %s5, %s534
          // Predicated region
          $region45: #{arit_policy_forward.1} parent=43 // pred_check
            %p536 = pneg %p533
          $region46: #{arit_policy_forward.1} parent=43 // pred_check_branch
            %538 = sbr.rel (%p536) target = $region48
          $region47: #{arit_policy_forward.1} parent=43 // pred_region
            // Predicated region
            $region49: #{arit_policy_forward.1} parent=47 // pred_check
              _
            $region50: #{arit_policy_forward.1} parent=47 // pred_check_branch
              %540 = sbr.rel (0) target = $region52
            $region51: #{arit_policy_forward.1} parent=47 // pred_region
              // Predicated region
              $region71: #{arit_policy_forward.1} parent=51 // pred_check
                _
              $region72: #{arit_policy_forward.1} parent=51 // pred_check_branch
                %591 = sbr.rel (0) target = $region74
              $region73: #{arit_policy_forward.1} parent=51 // pred_region
                %s592 = sshrl.u32 %s531, 1
                // While loop
                $region75: #{arit_policy_forward.1} parent=73 // loop_pre_header
                  _
                $region76: #{arit_policy_forward.1} parent=73 // loop_header
                  %s594 = sphi 0, %s596
                  %p595 = scmp.ge.s32.totalorder %s594, %s592
                  %s599 = sphi 0, %s608
                  %s600 = sphi %s524, %s611
                  %s601 = sphi %s535, %s612
                $region77: #{arit_policy_forward.1} parent=73 // loop_header_branch
                  %598 = sbr.rel (%p595) target = $region81
                $region78: #{arit_policy_forward.1} parent=73 // loop_body
                  %v602 = vld [vmem:[%s600] sm:$0xff]
                  %603 = vst [vmem:[%s601] sm:$0xff] %v602
                  %v604 = vld [vmem:[%s600 + $0x8] sm:$0xff]
                  %605 = vst [vmem:[%s601 + $0x8] sm:$0xff] %v604
                  %s606 = sadd.s32 1, %s599
                  %p607 = scmp.ge.s32.totalorder %s606, %s592
                  %s608 = scalar_select %p607, 0, %s606
                  %s609 = smul.u32 %s608, 16
                  %s610 = smul.u32 %s608, 16
                  %s611 = scalar_lea.vmem %s524, %s609 [#allocation2]
                  %s612 = scalar_lea.vmem %s535, %s610
                $region79: #{arit_policy_forward.1} parent=73 // loop_footer
                  %s596 = sadd.s32 %s594, 1
                $region80: #{arit_policy_forward.1} parent=73 // loop_footer_branch
                  %593 = sbr.rel target = $region76
                $region81: #{arit_policy_forward.1} parent=73 // loop_exit
                  _
                %s613 = sshrl.u32 %s531, 1
                %s614 = sand.u32 %s531, 1
                %s615 = smul.u32 %s613, 2
                %s616 = smul.u32 8, %s615
                %s617 = scalar_lea.vmem %s524, %s616 [#allocation2]
                %s618 = smul.u32 8, %s615
                %s619 = scalar_lea.vmem %s535, %s618
                // While loop
                $region82: #{arit_policy_forward.1} parent=73 // loop_pre_header
                  _
                $region83: #{arit_policy_forward.1} parent=73 // loop_header
                  %s621 = sphi 0, %s623
                  %p622 = scmp.ge.s32.totalorder %s621, %s614
                  %s626 = sphi 0, %s633
                  %s627 = sphi %s617, %s636
                  %s628 = sphi %s619, %s637
                $region84: #{arit_policy_forward.1} parent=73 // loop_header_branch
                  %625 = sbr.rel (%p622) target = $region88
                $region85: #{arit_policy_forward.1} parent=73 // loop_body
                  %v629 = vld [vmem:[%s627] sm:$0xff]
                  %630 = vst [vmem:[%s628] sm:$0xff] %v629
                  %s631 = sadd.s32 1, %s626
                  %p632 = scmp.ge.s32.totalorder %s631, %s614
                  %s633 = scalar_select %p632, 0, %s631
                  %s634 = smul.u32 %s633, 8
                  %s635 = smul.u32 %s633, 8
                  %s636 = scalar_lea.vmem %s617, %s634 [#allocation2]
                  %s637 = scalar_lea.vmem %s619, %s635
                $region86: #{arit_policy_forward.1} parent=73 // loop_footer
                  %s623 = sadd.s32 %s621, 1
                $region87: #{arit_policy_forward.1} parent=73 // loop_footer_branch
                  %620 = sbr.rel target = $region83
                $region88: #{arit_policy_forward.1} parent=73 // loop_exit
                  _
              $region74: #{arit_policy_forward.1} parent=51 // pred_fallthru
                _
              // Predicated region
              $region89: #{arit_policy_forward.1} parent=51 // pred_check
                _
              $region90: #{arit_policy_forward.1} parent=51 // pred_check_branch
                %639 = sbr.rel target = $region92
              $region91: #{arit_policy_forward.1} parent=51 // pred_region
                _
              $region92: #{arit_policy_forward.1} parent=51 // pred_fallthru
                _
            $region52: #{arit_policy_forward.1} parent=47 // pred_fallthru
              _
            // Predicated region
            $region53: #{arit_policy_forward.1} parent=47 // pred_check
              _
            $region54: #{arit_policy_forward.1} parent=47 // pred_check_branch
              %542 = sbr.rel target = $region56
            $region55: #{arit_policy_forward.1} parent=47 // pred_region
              %s544 = sshrl.u32 %s531, 1
              // While loop
              $region57: #{arit_policy_forward.1} parent=55 // loop_pre_header
                _
              $region58: #{arit_policy_forward.1} parent=55 // loop_header
                %s546 = sphi 0, %s548
                %p547 = scmp.ge.s32.totalorder %s546, %s544
                %s551 = sphi 0, %s560
                %s552 = sphi %s524, %s563
                %s553 = sphi %s535, %s564
              $region59: #{arit_policy_forward.1} parent=55 // loop_header_branch
                %550 = sbr.rel (%p547) target = $region63
              $region60: #{arit_policy_forward.1} parent=55 // loop_body
                %v554 = vld [vmem:[%s552] sm:$0xff]
                %555 = vst [vmem:[%s553] sm:$0xff] %v554
                %v556 = vld [vmem:[%s552 + $0x8] sm:$0xff]
                %557 = vst [vmem:[%s553 + $0x8] sm:$0xff] %v556
                %s558 = sadd.s32 1, %s551
                %p559 = scmp.ge.s32.totalorder %s558, %s544
                %s560 = scalar_select %p559, 0, %s558
                %s561 = smul.u32 %s560, 16
                %s562 = smul.u32 %s560, 16
                %s563 = scalar_lea.vmem %s524, %s561 [#allocation2]
                %s564 = scalar_lea.vmem %s535, %s562
              $region61: #{arit_policy_forward.1} parent=55 // loop_footer
                %s548 = sadd.s32 %s546, 1
              $region62: #{arit_policy_forward.1} parent=55 // loop_footer_branch
                %545 = sbr.rel target = $region58
              $region63: #{arit_policy_forward.1} parent=55 // loop_exit
                _
              %s565 = sshrl.u32 %s531, 1
              %s566 = sand.u32 %s531, 1
              %s567 = smul.u32 %s565, 2
              %s568 = smul.u32 8, %s567
              %s569 = scalar_lea.vmem %s524, %s568 [#allocation2]
              %s570 = smul.u32 8, %s567
              %s571 = scalar_lea.vmem %s535, %s570
              // While loop
              $region64: #{arit_policy_forward.1} parent=55 // loop_pre_header
                _
              $region65: #{arit_policy_forward.1} parent=55 // loop_header
                %s573 = sphi 0, %s575
                %p574 = scmp.ge.s32.totalorder %s573, %s566
                %s578 = sphi 0, %s585
                %s579 = sphi %s569, %s588
                %s580 = sphi %s571, %s589
              $region66: #{arit_policy_forward.1} parent=55 // loop_header_branch
                %577 = sbr.rel (%p574) target = $region70
              $region67: #{arit_policy_forward.1} parent=55 // loop_body
                %v581 = vld [vmem:[%s579] sm:$0xff]
                %582 = vst [vmem:[%s580] sm:$0xff] %v581
                %s583 = sadd.s32 1, %s578
                %p584 = scmp.ge.s32.totalorder %s583, %s566
                %s585 = scalar_select %p584, 0, %s583
                %s586 = smul.u32 %s585, 8
                %s587 = smul.u32 %s585, 8
                %s588 = scalar_lea.vmem %s569, %s586 [#allocation2]
                %s589 = scalar_lea.vmem %s571, %s587
              $region68: #{arit_policy_forward.1} parent=55 // loop_footer
                %s575 = sadd.s32 %s573, 1
              $region69: #{arit_policy_forward.1} parent=55 // loop_footer_branch
                %572 = sbr.rel target = $region65
              $region70: #{arit_policy_forward.1} parent=55 // loop_exit
                _
            $region56: #{arit_policy_forward.1} parent=47 // pred_fallthru
              _
          $region48: #{arit_policy_forward.1} parent=43 // pred_fallthru
            _
          %640 = vnop
        $region44: #{arit_policy_forward.1} parent=39 // pred_fallthru
          _
      $region40: #{arit_policy_forward.1} parent=5 // pred_fallthru
        _
      %p641 = scmp.le.s32.totalorder 2, %s11
      // Predicated region
      $region93: #{arit_policy_forward.1} parent=5 // pred_check
        %p642 = pneg %p641
      $region94: #{arit_policy_forward.1} parent=5 // pred_check_branch
        %644 = sbr.rel (%p642) target = $region96
      $region95: #{arit_policy_forward.1} parent=5 // pred_region
        %s645 = ssub.s32 %s11, 2
        // Predicated region
        $region97: #{arit_policy_forward.1} parent=95 // pred_check
          %p646 = pneg %p150
        $region98: #{arit_policy_forward.1} parent=95 // pred_check_branch
          %648 = sbr.rel (%p646) target = $region100
        $region99: #{arit_policy_forward.1} parent=95 // pred_region
          %s649 = sand.u32 %s135, 1
          %s650 = sand.u32 %s135, 1
          %s651 = smul.addr %s650, 16
          %s652 = scalar_lea.vmem [#allocation2], %s651
        $region100: #{arit_policy_forward.1} parent=95 // pred_fallthru
          _
      $region96: #{arit_policy_forward.1} parent=5 // pred_fallthru
        _
    $region6: #{arit_policy_forward.1} parent=1 // loop_footer
      %s15 = sadd.s32 1, %s11
    $region7: #{arit_policy_forward.1} parent=1 // loop_footer_branch
      %10 = sbr.rel target = $region3
    $region8: #{arit_policy_forward.1} parent=1 // loop_exit
      _

</llo_original>
